<compile_context>
chip_gen: v7x
topology: tpu7x:2x2x1
jax: 0.10.0
libtpu: 0.0.40
codegen_flags: <defaults>
</compile_context>

<pallas_src>
import functools

import jax
import jax.numpy as jnp
from jax import lax
from jax.experimental import pallas as pl
from jax.experimental.pallas import tpu as pltpu

BN_EPS = 1e-5


# ----------------------------------------------------------------------------
# Kernel
# ----------------------------------------------------------------------------
def _bn_scale_shift(h_stats, gamma, beta, inv_n):
    """Training-mode BatchNorm1d (biased variance, eps=1e-5) folded to a single
    per-feature (scale, shift) pair: y = h*scale + shift.

    One-pass stats: mean = sum/n, var = sum(h*h)/n - mean^2 (clamped >= 0).
    gamma is folded into the rsqrt scale."""
    mean = jnp.sum(h_stats, axis=0, keepdims=True) * inv_n
    var = jnp.sum(h_stats * h_stats, axis=0, keepdims=True) * inv_n - mean * mean
    var = jnp.maximum(var, 0.0)            # one-pass variance can go slightly negative
    scale = gamma * lax.rsqrt(var + BN_EPS)
    shift = beta - mean * scale
    return scale, shift


def decoder_kernel(n_ref,                                  # scalar prefetch (SMEM)
                   x_ref, w1_ref, g1_ref, be1_ref,
                   w2_ref, g2_ref, be2_ref,
                   w3_ref, b3_ref,
                   o_ref,
                   h1_ref, acc_ref,                        # VMEM scratch (resident)
                   *, batch_padded):
    j = pl.program_id(0)
    n = n_ref[0]
    inv_n = 1.0 / n.astype(jnp.float32)

    @pl.when(j == 0)
    def _():
        # Layer 1 (computed once, stays resident): Linear (bias cancelled by
        # BN) + BN(train) + ReLU.  Padded batch rows of x are exactly zero and
        # there is no bias, so they contribute nothing to the sums -> no row
        # mask needed for the layer-1 statistics.
        h1 = jnp.dot(x_ref[...], w1_ref[...], preferred_element_type=jnp.float32)
        scale, shift = _bn_scale_shift(h1, g1_ref[...], be1_ref[...], inv_n)
        h1_ref[...] = jnp.maximum(h1 * scale + shift, 0.0).astype(h1_ref.dtype)
        acc_ref[...] = jnp.zeros_like(acc_ref)

    # Layer 2, this H2-feature tile (w2 streamed): Linear + BN(train) + ReLU.
    h2 = jnp.dot(h1_ref[...], w2_ref[...], preferred_element_type=jnp.float32)
    if batch_padded:
        # Post-BN h1 has nonzero padded rows, so exclude them from the stats.
        row = lax.broadcasted_iota(jnp.int32, h2.shape, 0)
        h2_stats = jnp.where(row < n, h2, 0.0)
    else:
        h2_stats = h2
    scale, shift = _bn_scale_shift(h2_stats, g2_ref[...], be2_ref[...], inv_n)
    # Epilogue emits bf16 directly (single pass; next matmul operand dtype).
    h2a = jnp.maximum(h2 * scale + shift, 0.0).astype(jnp.bfloat16)

    # Layer 3: accumulate this tile's K-contribution (w3 streamed as K-tiles).
    acc_ref[...] += jnp.dot(h2a, w3_ref[...], preferred_element_type=jnp.float32)

    @pl.when(j == pl.num_programs(0) - 1)
    def _():
        o_ref[...] = (acc_ref[...] + b3_ref[...]).astype(o_ref.dtype)


# ----------------------------------------------------------------------------
# Padding helpers / one-time parameter prep
# ----------------------------------------------------------------------------
def _round_up(n, m):
    return ((n + m - 1) // m) * m


def _pad2(a, rows, cols):
    return jnp.pad(a, ((0, rows - a.shape[0]), (0, cols - a.shape[1])))


def prepare_params(params):
    """Pad feature dims to lane multiples (128) and cast MXU operands to bf16.

    Call ONCE (e.g. at model-load time); the result is reused by every
    `decoder_forward` call, so no per-call pad/cast HBM traffic for weights.
    Returns (prepped_arrays, dims) where dims = (D_in, H1, H2, D_out)."""
    D_in, H1 = params["w1"].shape
    H2 = params["w2"].shape[1]
    D_out = params["w3"].shape[1]
    Dp, H1p, H2p, Op = (_round_up(d, 128) for d in (D_in, H1, H2, D_out))

    prepped = {
        # b1/b2 intentionally omitted: a bias added right before training-mode
        # BatchNorm is cancelled exactly by the mean subtraction.
        "w1": _pad2(params["w1"], Dp, H1p).astype(jnp.bfloat16),
        "g1": _pad2(params["g1"], 1, H1p),
        "be1": _pad2(params["be1"], 1, H1p),
        "w2": _pad2(params["w2"], H1p, H2p).astype(jnp.bfloat16),
        "g2": _pad2(params["g2"], 1, H2p),
        "be2": _pad2(params["be2"], 1, H2p),
        "w3": _pad2(params["w3"], H2p, Op).astype(jnp.bfloat16),
        "b3": _pad2(params["b3"], 1, Op),
    }
    return prepped, (D_in, H1, H2, D_out)


def _vmem_limit_bytes(Bp, Dp, H1p, tn2, Op):
    """Rough over-estimate of VMEM need (double-buffered blocks + scratch)."""
    bf, f = 2, 4
    blocks = (Bp * Dp * bf + Dp * H1p * bf + 2 * H1p * f      # x, w1, g1/be1
              + H1p * tn2 * bf + 2 * tn2 * f                  # w2/g2/be2 tiles
              + tn2 * Op * bf + Op * f                        # w3 tile, b3
              + Bp * Op * f)                                  # output block
    scratch = Bp * H1p * bf + Bp * Op * f
    est = 2 * blocks + scratch + (4 << 20)
    # Never below the 32 MiB default scoped limit; stay within v7x's 64 MiB.
    return int(min(64 << 20, max(32 << 20, est)))


# ----------------------------------------------------------------------------
# Forward wrapper
# ----------------------------------------------------------------------------
@functools.partial(jax.jit, static_argnames=("dims", "tn2"))
def decoder_forward(x, prepped, dims, n_valid=None, *, tn2=128):
    """x: (B, D_in) float32.  prepped/dims: from prepare_params()."""
    B, D_in = x.shape
    D_out = dims[3]
    w1, g1, be1 = prepped["w1"], prepped["g1"], prepped["be1"]
    w2, g2, be2 = prepped["w2"], prepped["g2"], prepped["be2"]
    w3, b3 = prepped["w3"], prepped["b3"]

    Dp, H1p = w1.shape
    H2p = w2.shape[1]
    Op = w3.shape[1]
    Bp = _round_up(max(B, 8), 8)

    tn2 = min(tn2, H2p)
    assert H2p % tn2 == 0, "tile width must divide the padded H2"
    grid = (H2p // tn2,)

    # Per-call input prep (weights were padded/cast once in prepare_params).
    xb = jnp.pad(x, ((0, Bp - B), (0, Dp - D_in))).astype(jnp.bfloat16)

    if n_valid is None:
        nv = jnp.full((1,), B, jnp.int32)
        batch_padded = B != Bp
    else:
        # Caller supplies the true batch length at runtime; emit the layer-2
        # row mask unconditionally since the count is only known at runtime.
        nv = jnp.asarray(n_valid, jnp.int32).reshape((1,))
        batch_padded = True

    out_p = pl.pallas_call(
        functools.partial(decoder_kernel, batch_padded=batch_padded),
        out_shape=jax.ShapeDtypeStruct((Bp, Op), jnp.float32),
        grid_spec=pltpu.PrefetchScalarGridSpec(
            num_scalar_prefetch=1,
            grid=grid,
            in_specs=[
                pl.BlockSpec((Bp, Dp), lambda j, n: (0, 0)),     # x (resident)
                pl.BlockSpec((Dp, H1p), lambda j, n: (0, 0)),    # w1 (small, resident)
                pl.BlockSpec((1, H1p), lambda j, n: (0, 0)),     # gamma1
                pl.BlockSpec((1, H1p), lambda j, n: (0, 0)),     # beta1
                pl.BlockSpec((H1p, tn2), lambda j, n: (0, j)),   # w2 streamed N-tiles
                pl.BlockSpec((1, tn2), lambda j, n: (0, j)),     # gamma2 tile
                pl.BlockSpec((1, tn2), lambda j, n: (0, j)),     # beta2 tile
                pl.BlockSpec((tn2, Op), lambda j, n: (j, 0)),    # w3 streamed K-tiles
                pl.BlockSpec((1, Op), lambda j, n: (0, 0)),      # b3
            ],
            out_specs=pl.BlockSpec((Bp, Op), lambda j, n: (0, 0)),
            scratch_shapes=[
                pltpu.VMEM((Bp, H1p), jnp.bfloat16),   # h1 (post BN+ReLU), resident
                pltpu.VMEM((Bp, Op), jnp.float32),     # layer-3 accumulator
            ]),
        compiler_params=pltpu.CompilerParams(
            dimension_semantics=("arbitrary",),        # reduction over H2 tiles
            vmem_limit_bytes=_vmem_limit_bytes(Bp, Dp, H1p, tn2, Op)),
    )(nv, xb, w1, g1, be1, w2, g2, be2, w3, b3)

    return out_p[:B, :D_out]


# ----------------------------------------------------------------------------
# Params / references
# ----------------------------------------------------------------------------
def init_params(key, D_in, H1, H2, D_out):
    """Synthetic init mimicking nn.Linear / BatchNorm1d (weights transposed to
    (in_features, out_features); biases / gamma / beta kept 2-D)."""
    ks = jax.random.split(key, 6)

    def linear(kw, kb, fan_in, fan_out):
        bound = 1.0 / jnp.sqrt(fan_in)
        w = jax.random.uniform(kw, (fan_in, fan_out), jnp.float32, -bound, bound)
        b = jax.random.uniform(kb, (1, fan_out), jnp.float32, -bound, bound)
        return w, b

    w1, b1 = linear(ks[0], ks[1], D_in, H1)
    w2, b2 = linear(ks[2], ks[3], H1, H2)
    w3, b3 = linear(ks[4], ks[5], H2, D_out)

    return {
        "w1": w1, "b1": b1,
        "g1": jnp.ones((1, H1), jnp.float32), "be1": jnp.zeros((1, H1), jnp.float32),
        "w2": w2, "b2": b2,
        "g2": jnp.ones((1, H2), jnp.float32), "be2": jnp.zeros((1, H2), jnp.float32),
        "w3": w3, "b3": b3,
    }


def _bn_relu_ref(h, g, b):
    m = jnp.mean(h, axis=0, keepdims=True)
    v = jnp.mean((h - m) ** 2, axis=0, keepdims=True)
    return jnp.maximum((h - m) / jnp.sqrt(v + BN_EPS) * g + b, 0.0)


def decoder_reference_f32(x, p):
    """Pure-f32 reference: exact PyTorch training-mode forward semantics."""
    h = _bn_relu_ref(x @ p["w1"] + p["b1"], p["g1"], p["be1"])
    h = _bn_relu_ref(h @ p["w2"] + p["b2"], p["g2"], p["be2"])
    return h @ p["w3"] + p["b3"]


def decoder_reference_matched(x, p):
    """Same PyTorch semantics (incl. b1/b2, two-pass variance), but with matmul
    operands rounded to bf16 (f32 accumulate) to mirror the kernel's MXU
    precision — used for a tight numerical comparison."""
    def dot_bf16(a, w):
        return jnp.dot(a.astype(jnp.bfloat16), w.astype(jnp.bfloat16),
                       preferred_element_type=jnp.float32)

    h = _bn_relu_ref(dot_bf16(x, p["w1"]) + p["b1"], p["g1"], p["be1"])
    h = _bn_relu_ref(dot_bf16(h, p["w2"]) + p["b2"], p["g2"], p["be2"])
    return dot_bf16(h, p["w3"]) + p["b3"]


# ----------------------------------------------------------------------------
# Demo
# ----------------------------------------------------------------------------
if __name__ == "__main__":
    # Small shapes consistent with the module's (D_in, H1, H2, D_out) signature.
    # B=6 exercises the padded-batch mask path; H2=256 exercises a 2-step
    # streamed grid with layer-3 K-accumulation.
    B, D_in, H1, H2, D_out = 6, 16, 32, 256, 24

    key = jax.random.PRNGKey(0)
    kx, kp = jax.random.split(key)
    x = jax.random.normal(kx, (B, D_in), jnp.float32)
    params = init_params(kp, D_in, H1, H2, D_out)

    # One-time weight padding / bf16 cast (hoisted out of the per-call path).
    prepped, dims = prepare_params(params)

    out = decoder_forward(x, prepped, dims=dims)
    out = jax.block_until_ready(out)
    assert out.shape == (B, D_out)

    # Tight check against a reference with matched MXU precision (verifies the
    # fused padding/masking/BN math, incl. that dropping b1/b2 is a no-op).
    ref_matched = decoder_reference_matched(x, params)
    assert jnp.allclose(out, ref_matched, atol=5e-3, rtol=5e-3), \
        "mismatch vs matched-precision reference"

    # Loose sanity check against the full-f32 PyTorch-semantics reference
    # (differences are pure bf16 quantization noise of the MXU operands).
    ref_f32 = decoder_reference_f32(x, params)
    assert jnp.allclose(out, ref_f32, atol=0.25, rtol=0.05), \
        "mismatch vs f32 reference"

    print("KERNEL_OK")
</pallas_src>

<mosaic_0001>
module attributes {stable_mosaic.version = 11 : i64} {
  func.func @decoder_kernel(%arg0: i32, %arg1: memref<1xi32, #tpu.memory_space<smem>>, %arg2: memref<8x128xbf16, #tpu.memory_space<vmem>>, %arg3: memref<128x128xbf16, #tpu.memory_space<vmem>>, %arg4: memref<1x128xf32, #tpu.memory_space<vmem>>, %arg5: memref<1x128xf32, #tpu.memory_space<vmem>>, %arg6: memref<128x128xbf16, #tpu.memory_space<vmem>>, %arg7: memref<1x128xf32, #tpu.memory_space<vmem>>, %arg8: memref<1x128xf32, #tpu.memory_space<vmem>>, %arg9: memref<128x128xbf16, #tpu.memory_space<vmem>>, %arg10: memref<1x128xf32, #tpu.memory_space<vmem>>, %arg11: memref<8x128xf32, #tpu.memory_space<vmem>>, %arg12: memref<8x128xbf16, #tpu.memory_space<vmem>>, %arg13: memref<8x128xf32, #tpu.memory_space<vmem>>) attributes {dimension_semantics = [#tpu.dimension_semantics<arbitrary>], iteration_bounds = array<i64: 2>, scalar_prefetch = 1 : i64, scratch_operands = 2 : i64, tpu.core_type = #tpu.core_type<tc>, window_params = [{pipeline_mode = #tpu.pipeline_mode<synchronous>, transform_indices = @transform_0, window_bounds = array<i64: 8, 128>}, {pipeline_mode = #tpu.pipeline_mode<synchronous>, transform_indices = @transform_1, window_bounds = array<i64: 128, 128>}, {pipeline_mode = #tpu.pipeline_mode<synchronous>, transform_indices = @transform_2, window_bounds = array<i64: 1, 128>}, {pipeline_mode = #tpu.pipeline_mode<synchronous>, transform_indices = @transform_3, window_bounds = array<i64: 1, 128>}, {transform_indices = @transform_4, window_bounds = array<i64: 128, 128>}, {transform_indices = @transform_5, window_bounds = array<i64: 1, 128>}, {transform_indices = @transform_6, window_bounds = array<i64: 1, 128>}, {transform_indices = @transform_7, window_bounds = array<i64: 128, 128>}, {pipeline_mode = #tpu.pipeline_mode<synchronous>, transform_indices = @transform_8, window_bounds = array<i64: 1, 128>}, {pipeline_mode = #tpu.pipeline_mode<synchronous>, transform_indices = @transform_9, window_bounds = array<i64: 8, 128>}]} {
    %c0 = arith.constant 0 : index
    %0 = memref.load %arg1[%c0] : memref<1xi32, #tpu.memory_space<smem>>
    %1 = arith.sitofp %0 : i32 to f32
    %cst = arith.constant 1.000000e+00 : f32
    %2 = arith.divf %cst, %1 : f32
    %c0_i32 = arith.constant 0 : i32
    %3 = arith.cmpi eq, %arg0, %c0_i32 : i32
    %4 = arith.extui %3 : i1 to i32
    %c0_i32_0 = arith.constant 0 : i32
    %5 = arith.cmpi ne, %4, %c0_i32_0 : i32
    scf.if %5 {
      %c0_24 = arith.constant 0 : index
      %c0_25 = arith.constant 0 : index
      %50 = vector.load %arg2[%c0_24, %c0_25] : memref<8x128xbf16, #tpu.memory_space<vmem>>, vector<8x128xbf16>
      %c0_26 = arith.constant 0 : index
      %c0_27 = arith.constant 0 : index
      %51 = vector.load %arg3[%c0_26, %c0_27] : memref<128x128xbf16, #tpu.memory_space<vmem>>, vector<128x128xbf16>
      %cst_28 = arith.constant dense<0.000000e+00> : vector<8x128xf32>
      %52 = tpu.matmul %50, %51, %cst_28 {dimension_numbers = #tpu.dot_dimension_numbers<[1], [0], [0], [1], [0, 0, 1, 1], [], []>} : vector<8x128xbf16>, vector<128x128xbf16>, vector<8x128xf32> -> vector<8x128xf32>
      %c0_29 = arith.constant 0 : index
      %c0_30 = arith.constant 0 : index
      %53 = vector.load %arg4[%c0_29, %c0_30] : memref<1x128xf32, #tpu.memory_space<vmem>>, vector<1x128xf32>
      %c0_31 = arith.constant 0 : index
      %c0_32 = arith.constant 0 : index
      %54 = vector.load %arg5[%c0_31, %c0_32] : memref<1x128xf32, #tpu.memory_space<vmem>>, vector<1x128xf32>
      %cst_33 = arith.constant dense<0.000000e+00> : vector<128xf32>
      %55 = vector.multi_reduction <add>, %52, %cst_33 [0] : vector<8x128xf32> to vector<128xf32>
      %56 = vector.shape_cast %55 : vector<128xf32> to vector<1x128xf32>
      %57 = vector.broadcast %2 : f32 to vector<1x128xf32>
      %58 = arith.mulf %56, %57 : vector<1x128xf32>
      %59 = arith.mulf %52, %52 : vector<8x128xf32>
      %cst_34 = arith.constant dense<0.000000e+00> : vector<128xf32>
      %60 = vector.multi_reduction <add>, %59, %cst_34 [0] : vector<8x128xf32> to vector<128xf32>
      %61 = vector.shape_cast %60 : vector<128xf32> to vector<1x128xf32>
      %62 = vector.broadcast %2 : f32 to vector<1x128xf32>
      %63 = arith.mulf %61, %62 : vector<1x128xf32>
      %64 = arith.mulf %58, %58 : vector<1x128xf32>
      %65 = arith.subf %63, %64 : vector<1x128xf32>
      %cst_35 = arith.constant 0.000000e+00 : f32
      %66 = vector.broadcast %cst_35 : f32 to vector<1x128xf32>
      %67 = arith.maximumf %65, %66 : vector<1x128xf32>
      %cst_36 = arith.constant 9.99999974E-6 : f32
      %68 = vector.broadcast %cst_36 : f32 to vector<1x128xf32>
      %69 = arith.addf %67, %68 : vector<1x128xf32>
      %70 = math.rsqrt %69 : vector<1x128xf32>
      %71 = arith.mulf %53, %70 : vector<1x128xf32>
      %72 = arith.mulf %58, %71 : vector<1x128xf32>
      %73 = arith.subf %54, %72 : vector<1x128xf32>
      %74 = vector.broadcast %71 : vector<1x128xf32> to vector<8x128xf32>
      %75 = arith.mulf %52, %74 : vector<8x128xf32>
      %76 = vector.broadcast %73 : vector<1x128xf32> to vector<8x128xf32>
      %77 = arith.addf %75, %76 : vector<8x128xf32>
      %cst_37 = arith.constant 0.000000e+00 : f32
      %78 = vector.broadcast %cst_37 : f32 to vector<8x128xf32>
      %79 = arith.maximumf %77, %78 : vector<8x128xf32>
      %80 = arith.truncf %79 : vector<8x128xf32> to vector<8x128xbf16>
      %c0_38 = arith.constant 0 : index
      %c0_39 = arith.constant 0 : index
      %81 = vector.load %arg12[%c0_38, %c0_39] : memref<8x128xbf16, #tpu.memory_space<vmem>>, vector<8x128xbf16>
      tpu.vector_store %arg12[%c0_38, %c0_39], %80 {strides = array<i32>} : memref<8x128xbf16, #tpu.memory_space<vmem>>, vector<8x128xbf16>,
      %cst_40 = arith.constant 0.000000e+00 : f32
      %82 = vector.broadcast %cst_40 : f32 to vector<8x128xf32>
      %c0_41 = arith.constant 0 : index
      %c0_42 = arith.constant 0 : index
      %83 = vector.load %arg13[%c0_41, %c0_42] : memref<8x128xf32, #tpu.memory_space<vmem>>, vector<8x128xf32>
      tpu.vector_store %arg13[%c0_41, %c0_42], %82 {strides = array<i32>} : memref<8x128xf32, #tpu.memory_space<vmem>>, vector<8x128xf32>,
    } else {
    }
    %c0_1 = arith.constant 0 : index
    %c0_2 = arith.constant 0 : index
    %6 = vector.load %arg12[%c0_1, %c0_2] : memref<8x128xbf16, #tpu.memory_space<vmem>>, vector<8x128xbf16>
    %c0_3 = arith.constant 0 : index
    %c0_4 = arith.constant 0 : index
    %7 = vector.load %arg6[%c0_3, %c0_4] : memref<128x128xbf16, #tpu.memory_space<vmem>>, vector<128x128xbf16>
    %cst_5 = arith.constant dense<0.000000e+00> : vector<8x128xf32>
    %8 = tpu.matmul %6, %7, %cst_5 {dimension_numbers = #tpu.dot_dimension_numbers<[1], [0], [0], [1], [0, 0, 1, 1], [], []>} : vector<8x128xbf16>, vector<128x128xbf16>, vector<8x128xf32> -> vector<8x128xf32>
    %9 = tpu.iota {dimensions = array<i32: 0>} : vector<8x128xi32>
    %10 = vector.broadcast %0 : i32 to vector<8x128xi32>
    %11 = arith.cmpi slt, %9, %10 : vector<8x128xi32>
    %cst_6 = arith.constant 0.000000e+00 : f32
    %12 = vector.broadcast %cst_6 : f32 to vector<8x128xf32>
    %13 = arith.select %11, %8, %12 : vector<8x128xi1>, vector<8x128xf32>
    %c0_7 = arith.constant 0 : index
    %c0_8 = arith.constant 0 : index
    %14 = vector.load %arg7[%c0_7, %c0_8] : memref<1x128xf32, #tpu.memory_space<vmem>>, vector<1x128xf32>
    %c0_9 = arith.constant 0 : index
    %c0_10 = arith.constant 0 : index
    %15 = vector.load %arg8[%c0_9, %c0_10] : memref<1x128xf32, #tpu.memory_space<vmem>>, vector<1x128xf32>
    %cst_11 = arith.constant dense<0.000000e+00> : vector<128xf32>
    %16 = vector.multi_reduction <add>, %13, %cst_11 [0] : vector<8x128xf32> to vector<128xf32>
    %17 = vector.shape_cast %16 : vector<128xf32> to vector<1x128xf32>
    %18 = vector.broadcast %2 : f32 to vector<1x128xf32>
    %19 = arith.mulf %17, %18 : vector<1x128xf32>
    %20 = arith.mulf %13, %13 : vector<8x128xf32>
    %cst_12 = arith.constant dense<0.000000e+00> : vector<128xf32>
    %21 = vector.multi_reduction <add>, %20, %cst_12 [0] : vector<8x128xf32> to vector<128xf32>
    %22 = vector.shape_cast %21 : vector<128xf32> to vector<1x128xf32>
    %23 = vector.broadcast %2 : f32 to vector<1x128xf32>
    %24 = arith.mulf %22, %23 : vector<1x128xf32>
    %25 = arith.mulf %19, %19 : vector<1x128xf32>
    %26 = arith.subf %24, %25 : vector<1x128xf32>
    %cst_13 = arith.constant 0.000000e+00 : f32
    %27 = vector.broadcast %cst_13 : f32 to vector<1x128xf32>
    %28 = arith.maximumf %26, %27 : vector<1x128xf32>
    %cst_14 = arith.constant 9.99999974E-6 : f32
    %29 = vector.broadcast %cst_14 : f32 to vector<1x128xf32>
    %30 = arith.addf %28, %29 : vector<1x128xf32>
    %31 = math.rsqrt %30 : vector<1x128xf32>
    %32 = arith.mulf %14, %31 : vector<1x128xf32>
    %33 = arith.mulf %19, %32 : vector<1x128xf32>
    %34 = arith.subf %15, %33 : vector<1x128xf32>
    %35 = vector.broadcast %32 : vector<1x128xf32> to vector<8x128xf32>
    %36 = arith.mulf %8, %35 : vector<8x128xf32>
    %37 = vector.broadcast %34 : vector<1x128xf32> to vector<8x128xf32>
    %38 = arith.addf %36, %37 : vector<8x128xf32>
    %cst_15 = arith.constant 0.000000e+00 : f32
    %39 = vector.broadcast %cst_15 : f32 to vector<8x128xf32>
    %40 = arith.maximumf %38, %39 : vector<8x128xf32>
    %41 = arith.truncf %40 : vector<8x128xf32> to vector<8x128xbf16>
    %c0_16 = arith.constant 0 : index
    %c0_17 = arith.constant 0 : index
    %42 = vector.load %arg13[%c0_16, %c0_17] : memref<8x128xf32, #tpu.memory_space<vmem>>, vector<8x128xf32>
    %c0_18 = arith.constant 0 : index
    %c0_19 = arith.constant 0 : index
    %43 = vector.load %arg9[%c0_18, %c0_19] : memref<128x128xbf16, #tpu.memory_space<vmem>>, vector<128x128xbf16>
    %cst_20 = arith.constant dense<0.000000e+00> : vector<8x128xf32>
    %44 = tpu.matmul %41, %43, %cst_20 {dimension_numbers = #tpu.dot_dimension_numbers<[1], [0], [0], [1], [0, 0, 1, 1], [], []>} : vector<8x128xbf16>, vector<128x128xbf16>, vector<8x128xf32> -> vector<8x128xf32>
    %45 = arith.addf %42, %44 : vector<8x128xf32>
    %c0_21 = arith.constant 0 : index
    %c0_22 = arith.constant 0 : index
    %46 = vector.load %arg13[%c0_21, %c0_22] : memref<8x128xf32, #tpu.memory_space<vmem>>, vector<8x128xf32>
    tpu.vector_store %arg13[%c0_21, %c0_22], %45 {strides = array<i32>} : memref<8x128xf32, #tpu.memory_space<vmem>>, vector<8x128xf32>,
    %c1_i32 = arith.constant 1 : i32
    %47 = arith.cmpi eq, %arg0, %c1_i32 : i32
    %48 = arith.extui %47 : i1 to i32
    %c0_i32_23 = arith.constant 0 : i32
    %49 = arith.cmpi ne, %48, %c0_i32_23 : i32
    scf.if %49 {
      %c0_24 = arith.constant 0 : index
      %c0_25 = arith.constant 0 : index
      %50 = vector.load %arg13[%c0_24, %c0_25] : memref<8x128xf32, #tpu.memory_space<vmem>>, vector<8x128xf32>
      %c0_26 = arith.constant 0 : index
      %c0_27 = arith.constant 0 : index
      %51 = vector.load %arg10[%c0_26, %c0_27] : memref<1x128xf32, #tpu.memory_space<vmem>>, vector<1x128xf32>
      %52 = vector.broadcast %51 : vector<1x128xf32> to vector<8x128xf32>
      %53 = arith.addf %50, %52 : vector<8x128xf32>
      %c0_28 = arith.constant 0 : index
      %c0_29 = arith.constant 0 : index
      %54 = vector.load %arg11[%c0_28, %c0_29] : memref<8x128xf32, #tpu.memory_space<vmem>>, vector<8x128xf32>
      tpu.vector_store %arg11[%c0_28, %c0_29], %53 {strides = array<i32>} : memref<8x128xf32, #tpu.memory_space<vmem>>, vector<8x128xf32>,
    } else {
    }
    return
  }
  func.func @transform_0(%arg0: i32, %arg1: memref<1xi32, #tpu.memory_space<smem>>) -> (i32, i32) {
    %c0_i32 = arith.constant 0 : i32
    %c0_i32_0 = arith.constant 0 : i32
    %c0_i32_1 = arith.constant 0 : i32
    return %c0_i32, %c0_i32_0 : i32, i32
  }
  func.func @transform_1(%arg0: i32, %arg1: memref<1xi32, #tpu.memory_space<smem>>) -> (i32, i32) {
    %c0_i32 = arith.constant 0 : i32
    %c0_i32_0 = arith.constant 0 : i32
    %c0_i32_1 = arith.constant 0 : i32
    return %c0_i32, %c0_i32_0 : i32, i32
  }
  func.func @transform_2(%arg0: i32, %arg1: memref<1xi32, #tpu.memory_space<smem>>) -> (i32, i32) {
    %c0_i32 = arith.constant 0 : i32
    %c0_i32_0 = arith.constant 0 : i32
    %c0_i32_1 = arith.constant 0 : i32
    return %c0_i32, %c0_i32_0 : i32, i32
  }
  func.func @transform_3(%arg0: i32, %arg1: memref<1xi32, #tpu.memory_space<smem>>) -> (i32, i32) {
    %c0_i32 = arith.constant 0 : i32
    %c0_i32_0 = arith.constant 0 : i32
    %c0_i32_1 = arith.constant 0 : i32
    return %c0_i32, %c0_i32_0 : i32, i32
  }
  func.func @transform_4(%arg0: i32, %arg1: memref<1xi32, #tpu.memory_space<smem>>) -> (i32, i32) {
    %c0_i32 = arith.constant 0 : i32
    %c0_i32_0 = arith.constant 0 : i32
    return %c0_i32, %arg0 : i32, i32
  }
  func.func @transform_5(%arg0: i32, %arg1: memref<1xi32, #tpu.memory_space<smem>>) -> (i32, i32) {
    %c0_i32 = arith.constant 0 : i32
    %c0_i32_0 = arith.constant 0 : i32
    return %c0_i32, %arg0 : i32, i32
  }
  func.func @transform_6(%arg0: i32, %arg1: memref<1xi32, #tpu.memory_space<smem>>) -> (i32, i32) {
    %c0_i32 = arith.constant 0 : i32
    %c0_i32_0 = arith.constant 0 : i32
    return %c0_i32, %arg0 : i32, i32
  }
  func.func @transform_7(%arg0: i32, %arg1: memref<1xi32, #tpu.memory_space<smem>>) -> (i32, i32) {
    %c0_i32 = arith.constant 0 : i32
    %c0_i32_0 = arith.constant 0 : i32
    return %arg0, %c0_i32 : i32, i32
  }
  func.func @transform_8(%arg0: i32, %arg1: memref<1xi32, #tpu.memory_space<smem>>) -> (i32, i32) {
    %c0_i32 = arith.constant 0 : i32
    %c0_i32_0 = arith.constant 0 : i32
    %c0_i32_1 = arith.constant 0 : i32
    return %c0_i32, %c0_i32_0 : i32, i32
  }
  func.func @transform_9(%arg0: i32, %arg1: memref<1xi32, #tpu.memory_space<smem>>) -> (i32, i32) {
    %c0_i32 = arith.constant 0 : i32
    %c0_i32_0 = arith.constant 0 : i32
    %c0_i32_1 = arith.constant 0 : i32
    return %c0_i32, %c0_i32_0 : i32, i32
  }
}

</mosaic_0001>

<llo_original>
// kernel: decoder_forward.1
$region0: #{decoder_forward.1}
  #allocation0 [shape = 'u32[]', space=smem, size = 0x4, offset = 0x4, fixed_abs, tag = 'smem constant byte address 0x4 - core index']
  #allocation1 [shape = 'u32[144,128]{1,0:T(1,128)}', space=vmem, size = 0x12000, scoped, tag = 'internal scratch']
  #allocation2 [shape = 'bf16[8,128]{1,0:T(8,128)(2,1)}', space=vmem, size = 0x800, scoped, tag = 'scratch operand']
  #allocation3 [shape = 'f32[8,128]{1,0:T(8,128)}', space=vmem, size = 0x1000, scoped, tag = 'scratch operand']
  #allocation4 [shape = 's32[1]{0}', space=sflag, size = 0x4, scoped, tag = 'scoped memory for decoder_forward.1']
  #allocation5 [shape = 's32[1]{0:T(128)S(6)}', space=smem, size = 0x200, scoped, tag = 'prefetched SMEM operand 0']
  %s0 = inlined_call_operand.<no memory space> [shape: s32[1], index: 0, kind: input, shape index: {}]
  %s1 = inlined_call_operand.vmem [shape: bf16[8,128], index: 1, kind: input, shape index: {}]
  %s2 = inlined_call_operand.hbm [shape: bf16[128,128], index: 2, kind: input, shape index: {}]
  %s3 = inlined_call_operand.vmem [shape: f32[1,128], index: 3, kind: input, shape index: {}]
  %s4 = inlined_call_operand.vmem [shape: f32[1,128], index: 4, kind: input, shape index: {}]
  %s5 = inlined_call_operand.hbm [shape: bf16[128,256], index: 5, kind: input, shape index: {}]
  %s6 = inlined_call_operand.vmem [shape: f32[1,256], index: 6, kind: input, shape index: {}]
  %s7 = inlined_call_operand.vmem [shape: f32[1,256], index: 7, kind: input, shape index: {}]
  %s8 = inlined_call_operand.hbm [shape: bf16[256,128], index: 8, kind: input, shape index: {}]
  %s9 = inlined_call_operand.vmem [shape: f32[1,128], index: 9, kind: input, shape index: {}]
  %s10 = inlined_call_operand.hbm [shape: f32[8,128], index: 10, kind: output, shape index: {}]
  %s11 = sld [smem:[#allocation0]]
  $region89: #{decoder_forward.1} parent=0
    _
  %s13 = ssub.s32 1, %s11
  %s14 = scalar_select 0, %s13, %s11
  %15 = sst [smem:[#allocation5]] %s0
  $region1: #{decoder_forward.1} parent=0
    #allocation6 [shape = 'u8[32768]{0}', space=vmem, size = 0x8000, scoped, tag = 'input window, operand 2, single buffered']
    #allocation7 [shape = 's32[2]{0}', space=sflag, size = 0x8, scoped, tag = 'scoped memory for decoder_forward.1']
    #allocation8 [shape = 's32[2]{0}', space=sflag, size = 0x8, scoped, tag = 'scoped memory for decoder_forward.1']
    #allocation9 [shape = 'u8[65536]{0}', space=vmem, size = 0x10000, scoped, tag = 'input window, operand 5']
    #allocation10 [shape = 's32[2]{0}', space=sflag, size = 0x8, scoped, tag = 'scoped memory for decoder_forward.1']
    #allocation11 [shape = 'u8[65536]{0}', space=vmem, size = 0x10000, scoped, tag = 'input window, operand 8']
    #allocation12 [shape = 'u8[4096]{0}', space=vmem, size = 0x1000, scoped, tag = 'output window, operand 0, single buffered']
    %16 = vsyncpa [#allocation7], 0
    %17 = vsyncpa [#allocation10], 0
    %s18 = scalar_lea.sflag [#allocation10], 1
    %19 = vsyncpa %s18, 0
    %20 = vsyncpa [#allocation8], 0
    loop: start=0, step=1, limit=4
    $region2: #{decoder_forward.1} parent=1 // loop_pre_header
      _
    $region3: #{decoder_forward.1} parent=1 // loop_header
      %s22 = sphi 0, %s26
      %p23 = scmp.ge.s32.totalorder %s22, 4
      %s30 = sphi 0, %s30
      %s32 = sphi 0, %s30
      %s33 = sphi 0, %s32
      %s47 = sphi 0, %s33
      %s51 = sphi 0, %s51
      %s53 = sphi 0, %s51
      %s54 = sphi 0, %s53
      %s68 = sphi 0, %s54
      %s72 = sphi 0, %s72
      %s74 = sphi 0, %s72
      %s75 = sphi 0, %s74
      %s89 = sphi 0, %s75
      %s93 = sphi 0, %s93
      %s95 = sphi 0, %s93
      %s96 = sphi 0, %s95
      %s110 = sphi 0, %s96
      %s116 = sphi 0, %s118
      %s119 = sphi 0, %s116
      %s120 = sphi 0, %s119
      %s136 = sphi 0, %s120
      %s142 = sphi 0, %s144
      %s145 = sphi 0, %s142
      %s146 = sphi 0, %s145
      %s162 = sphi 0, %s146
      %s168 = sphi 0, %s170
      %s171 = sphi 0, %s168
      %s172 = sphi 0, %s171
      %s188 = sphi 0, %s172
      %s194 = sphi 0, %s196
      %s197 = sphi 0, %s194
      %s198 = sphi 0, %s197
      %s214 = sphi 0, %s198
      %s218 = sphi 0, %s218
      %s220 = sphi 0, %s218
      %s221 = sphi 0, %s220
      %s235 = sphi 0, %s221
      %s239 = sphi 0, %s239
      %s241 = sphi 0, %s239
      %s242 = sphi 0, %s241
      %s256 = sphi 0, %s242
    $region4: #{decoder_forward.1} parent=1 // loop_header_branch
      %25 = sbr.rel (%p23) target = $region8
    $region5: #{decoder_forward.1} parent=1 // loop_body
      %s27 = ssub.s32 %s22, 1
      %s28 = ssub.s32 %s22, 2
      %s29 = sadd.s32 %s22, 1
      %s31 = sadd.s32 %s30, 1
      %p34 = scmp.eq.s32.totalorder %s22, 1
      %p35 = scmp.ne.s32.totalorder %s30, %s32
      %p36 = scmp.eq.s32.totalorder %s22, 0
      %p37 = por %p35, %p36
      %p38 = scmp.ne.s32.totalorder %s30, %s32
      %p39 = scmp.eq.s32.totalorder %s27, 1
      %p40 = por %p38, %p39
      %p41 = scmp.ne.s32.totalorder %s32, %s33
      %p42 = scmp.eq.s32.totalorder %s27, 0
      %p43 = por %p41, %p42
      %p44 = scmp.ne.s32.totalorder %s32, %s33
      %p45 = scmp.eq.s32.totalorder %s28, 1
      %p46 = por %p44, %p45
      %p48 = scmp.ne.s32.totalorder %s33, %s47
      %p49 = scmp.eq.s32.totalorder %s28, 0
      %p50 = por %p48, %p49
      %s52 = sadd.s32 %s51, 1
      %p55 = scmp.eq.s32.totalorder %s22, 1
      %p56 = scmp.ne.s32.totalorder %s51, %s53
      %p57 = scmp.eq.s32.totalorder %s22, 0
      %p58 = por %p56, %p57
      %p59 = scmp.ne.s32.totalorder %s51, %s53
      %p60 = scmp.eq.s32.totalorder %s27, 1
      %p61 = por %p59, %p60
      %p62 = scmp.ne.s32.totalorder %s53, %s54
      %p63 = scmp.eq.s32.totalorder %s27, 0
      %p64 = por %p62, %p63
      %p65 = scmp.ne.s32.totalorder %s53, %s54
      %p66 = scmp.eq.s32.totalorder %s28, 1
      %p67 = por %p65, %p66
      %p69 = scmp.ne.s32.totalorder %s54, %s68
      %p70 = scmp.eq.s32.totalorder %s28, 0
      %p71 = por %p69, %p70
      %s73 = sadd.s32 %s72, 1
      %p76 = scmp.eq.s32.totalorder %s22, 1
      %p77 = scmp.ne.s32.totalorder %s72, %s74
      %p78 = scmp.eq.s32.totalorder %s22, 0
      %p79 = por %p77, %p78
      %p80 = scmp.ne.s32.totalorder %s72, %s74
      %p81 = scmp.eq.s32.totalorder %s27, 1
      %p82 = por %p80, %p81
      %p83 = scmp.ne.s32.totalorder %s74, %s75
      %p84 = scmp.eq.s32.totalorder %s27, 0
      %p85 = por %p83, %p84
      %p86 = scmp.ne.s32.totalorder %s74, %s75
      %p87 = scmp.eq.s32.totalorder %s28, 1
      %p88 = por %p86, %p87
      %p90 = scmp.ne.s32.totalorder %s75, %s89
      %p91 = scmp.eq.s32.totalorder %s28, 0
      %p92 = por %p90, %p91
      %s94 = sadd.s32 %s93, 1
      %p97 = scmp.eq.s32.totalorder %s22, 1
      %p98 = scmp.ne.s32.totalorder %s93, %s95
      %p99 = scmp.eq.s32.totalorder %s22, 0
      %p100 = por %p98, %p99
      %p101 = scmp.ne.s32.totalorder %s93, %s95
      %p102 = scmp.eq.s32.totalorder %s27, 1
      %p103 = por %p101, %p102
      %p104 = scmp.ne.s32.totalorder %s95, %s96
      %p105 = scmp.eq.s32.totalorder %s27, 0
      %p106 = por %p104, %p105
      %p107 = scmp.ne.s32.totalorder %s95, %s96
      %p108 = scmp.eq.s32.totalorder %s28, 1
      %p109 = por %p107, %p108
      %p111 = scmp.ne.s32.totalorder %s96, %s110
      %p112 = scmp.eq.s32.totalorder %s28, 0
      %p113 = por %p111, %p112
      %s114 = ssub.s32 %s22, %s29
      %p115 = scmp.eq.s32.totalorder %s114, 0
      %s117 = sadd.s32 %s116, 1
      %s118 = scalar_select %p115, %s116, %s117
      %p121 = pneg %p115
      %p122 = scmp.eq.s32.totalorder %s22, 1
      %p123 = por %p121, %p122
      %p124 = scmp.ne.s32.totalorder %s116, %s119
      %p125 = scmp.eq.s32.totalorder %s22, 0
      %p126 = por %p124, %p125
      %p127 = scmp.ne.s32.totalorder %s116, %s119
      %p128 = scmp.eq.s32.totalorder %s27, 1
      %p129 = por %p127, %p128
      %p130 = scmp.ne.s32.totalorder %s119, %s120
      %p131 = scmp.eq.s32.totalorder %s27, 0
      %p132 = por %p130, %p131
      %p133 = scmp.ne.s32.totalorder %s119, %s120
      %p134 = scmp.eq.s32.totalorder %s28, 1
      %p135 = por %p133, %p134
      %p137 = scmp.ne.s32.totalorder %s120, %s136
      %p138 = scmp.eq.s32.totalorder %s28, 0
      %p139 = por %p137, %p138
      %s140 = ssub.s32 %s22, %s29
      %p141 = scmp.eq.s32.totalorder %s140, 0
      %s143 = sadd.s32 %s142, 1
      %s144 = scalar_select %p141, %s142, %s143
      %p147 = pneg %p141
      %p148 = scmp.eq.s32.totalorder %s22, 1
      %p149 = por %p147, %p148
      %p150 = scmp.ne.s32.totalorder %s142, %s145
      %p151 = scmp.eq.s32.totalorder %s22, 0
      %p152 = por %p150, %p151
      %p153 = scmp.ne.s32.totalorder %s142, %s145
      %p154 = scmp.eq.s32.totalorder %s27, 1
      %p155 = por %p153, %p154
      %p156 = scmp.ne.s32.totalorder %s145, %s146
      %p157 = scmp.eq.s32.totalorder %s27, 0
      %p158 = por %p156, %p157
      %p159 = scmp.ne.s32.totalorder %s145, %s146
      %p160 = scmp.eq.s32.totalorder %s28, 1
      %p161 = por %p159, %p160
      %p163 = scmp.ne.s32.totalorder %s146, %s162
      %p164 = scmp.eq.s32.totalorder %s28, 0
      %p165 = por %p163, %p164
      %s166 = ssub.s32 %s22, %s29
      %p167 = scmp.eq.s32.totalorder %s166, 0
      %s169 = sadd.s32 %s168, 1
      %s170 = scalar_select %p167, %s168, %s169
      %p173 = pneg %p167
      %p174 = scmp.eq.s32.totalorder %s22, 1
      %p175 = por %p173, %p174
      %p176 = scmp.ne.s32.totalorder %s168, %s171
      %p177 = scmp.eq.s32.totalorder %s22, 0
      %p178 = por %p176, %p177
      %p179 = scmp.ne.s32.totalorder %s168, %s171
      %p180 = scmp.eq.s32.totalorder %s27, 1
      %p181 = por %p179, %p180
      %p182 = scmp.ne.s32.totalorder %s171, %s172
      %p183 = scmp.eq.s32.totalorder %s27, 0
      %p184 = por %p182, %p183
      %p185 = scmp.ne.s32.totalorder %s171, %s172
      %p186 = scmp.eq.s32.totalorder %s28, 1
      %p187 = por %p185, %p186
      %p189 = scmp.ne.s32.totalorder %s172, %s188
      %p190 = scmp.eq.s32.totalorder %s28, 0
      %p191 = por %p189, %p190
      %s192 = ssub.s32 %s22, %s29
      %p193 = scmp.eq.s32.totalorder %s192, 0
      %s195 = sadd.s32 %s194, 1
      %s196 = scalar_select %p193, %s194, %s195
      %p199 = pneg %p193
      %p200 = scmp.eq.s32.totalorder %s22, 1
      %p201 = por %p199, %p200
      %p202 = scmp.ne.s32.totalorder %s194, %s197
      %p203 = scmp.eq.s32.totalorder %s22, 0
      %p204 = por %p202, %p203
      %p205 = scmp.ne.s32.totalorder %s194, %s197
      %p206 = scmp.eq.s32.totalorder %s27, 1
      %p207 = por %p205, %p206
      %p208 = scmp.ne.s32.totalorder %s197, %s198
      %p209 = scmp.eq.s32.totalorder %s27, 0
      %p210 = por %p208, %p209
      %p211 = scmp.ne.s32.totalorder %s197, %s198
      %p212 = scmp.eq.s32.totalorder %s28, 1
      %p213 = por %p211, %p212
      %p215 = scmp.ne.s32.totalorder %s198, %s214
      %p216 = scmp.eq.s32.totalorder %s28, 0
      %p217 = por %p215, %p216
      %s219 = sadd.s32 %s218, 1
      %p222 = scmp.eq.s32.totalorder %s22, 1
      %p223 = scmp.ne.s32.totalorder %s218, %s220
      %p224 = scmp.eq.s32.totalorder %s22, 0
      %p225 = por %p223, %p224
      %p226 = scmp.ne.s32.totalorder %s218, %s220
      %p227 = scmp.eq.s32.totalorder %s27, 1
      %p228 = por %p226, %p227
      %p229 = scmp.ne.s32.totalorder %s220, %s221
      %p230 = scmp.eq.s32.totalorder %s27, 0
      %p231 = por %p229, %p230
      %p232 = scmp.ne.s32.totalorder %s220, %s221
      %p233 = scmp.eq.s32.totalorder %s28, 1
      %p234 = por %p232, %p233
      %p236 = scmp.ne.s32.totalorder %s221, %s235
      %p237 = scmp.eq.s32.totalorder %s28, 0
      %p238 = por %p236, %p237
      %s240 = sadd.s32 %s239, 1
      %p243 = scmp.eq.s32.totalorder %s22, 1
      %p244 = scmp.ne.s32.totalorder %s239, %s241
      %p245 = scmp.eq.s32.totalorder %s22, 0
      %p246 = por %p244, %p245
      %p247 = scmp.ne.s32.totalorder %s239, %s241
      %p248 = scmp.eq.s32.totalorder %s27, 1
      %p249 = por %p247, %p248
      %p250 = scmp.ne.s32.totalorder %s241, %s242
      %p251 = scmp.eq.s32.totalorder %s27, 0
      %p252 = por %p250, %p251
      %p253 = scmp.ne.s32.totalorder %s241, %s242
      %p254 = scmp.eq.s32.totalorder %s28, 1
      %p255 = por %p253, %p254
      %p257 = scmp.ne.s32.totalorder %s242, %s256
      %p258 = scmp.eq.s32.totalorder %s28, 0
      %p259 = por %p257, %p258
      %p260 = scmp.le.s32.totalorder 1, %s22
      %p261 = scmp.lt.s32.totalorder %s22, 3
      %p262 = pnand %p260, %p261
      %p263 = pneg %p262
      // Predicated region
      $region9: #{decoder_forward.1} parent=5 // pred_check
        _
      $region10: #{decoder_forward.1} parent=5 // pred_check_branch
        %265 = sbr.rel (%p262) target = $region12
      $region11: #{decoder_forward.1} parent=5 // pred_region
        %s266 = ssub.s32 %s22, 1
        // Predicated region
        $region13: #{decoder_forward.1} parent=11 // pred_check
          %p267 = pneg %p43
        $region14: #{decoder_forward.1} parent=11 // pred_check_branch
          %269 = sbr.rel (%p267) target = $region16
        $region15: #{decoder_forward.1} parent=11 // pred_region
          _
        $region16: #{decoder_forward.1} parent=11 // pred_fallthru
          _
        // Predicated region
        $region17: #{decoder_forward.1} parent=11 // pred_check
          %p270 = pneg %p64
        $region18: #{decoder_forward.1} parent=11 // pred_check_branch
          %272 = sbr.rel (%p270) target = $region20
        $region19: #{decoder_forward.1} parent=11 // pred_region
          %s274 = ssub.s32 1024, 1024
          %275 = vsyncadd [#allocation7], %s274
          %s276 = sshll.u32 [#allocation6], 4
          %s277 = int_to_ptr.vmem [resolvable:$true] %s276
          %282 = dma.hbm_to_vmem [thread:$0]  %s2, 1024, %s277, [#allocation7], 64, 64, 4
        $region20: #{decoder_forward.1} parent=11 // pred_fallthru
          _
        // Predicated region
        $region21: #{decoder_forward.1} parent=11 // pred_check
          %p283 = pneg %p85
        $region22: #{decoder_forward.1} parent=11 // pred_check_branch
          %285 = sbr.rel (%p283) target = $region24
        $region23: #{decoder_forward.1} parent=11 // pred_region
          _
        $region24: #{decoder_forward.1} parent=11 // pred_fallthru
          _
        // Predicated region
        $region25: #{decoder_forward.1} parent=11 // pred_check
          %p286 = pneg %p106
        $region26: #{decoder_forward.1} parent=11 // pred_check_branch
          %288 = sbr.rel (%p286) target = $region28
        $region27: #{decoder_forward.1} parent=11 // pred_region
          _
        $region28: #{decoder_forward.1} parent=11 // pred_fallthru
          _
        // Predicated region
        $region29: #{decoder_forward.1} parent=11 // pred_check
          %p289 = pneg %p231
        $region30: #{decoder_forward.1} parent=11 // pred_check_branch
          %291 = sbr.rel (%p289) target = $region32
        $region31: #{decoder_forward.1} parent=11 // pred_region
          _
        $region32: #{decoder_forward.1} parent=11 // pred_fallthru
          _
      $region12: #{decoder_forward.1} parent=5 // pred_fallthru
        _
      %p292 = scmp.lt.s32.totalorder %s22, 2
      // Predicated region
      $region33: #{decoder_forward.1} parent=5 // pred_check
        %p293 = pneg %p292
      $region34: #{decoder_forward.1} parent=5 // pred_check_branch
        %295 = sbr.rel (%p293) target = $region36
      $region35: #{decoder_forward.1} parent=5 // pred_region
        // Predicated region
        $region37: #{decoder_forward.1} parent=35 // pred_check
          %p296 = pneg %p126
        $region38: #{decoder_forward.1} parent=35 // pred_check_branch
          %298 = sbr.rel (%p296) target = $region40
        $region39: #{decoder_forward.1} parent=35 // pred_region
          %s299 = sand.u32 %s22, 1
          %s300 = scalar_lea.sflag [#allocation10], %s299
          %s301 = sand.u32 %s116, 1
          %s302 = smul.addr %s301, 64
          %s303 = scalar_lea.vmem [#allocation9], %s302
          %s305 = ssub.s32 1024, 1024
          %306 = vsyncadd %s300, %s305
          %s307 = smul.addr %s22, 64
          %s308 = scalar_lea.hbm %s5, %s307
          %s309 = sshll.u32 %s303, 4
          %s310 = int_to_ptr.vmem [resolvable:$true] %s309
          %315 = dma.hbm_to_vmem [thread:$0]  %s308, 1024, %s310, %s300, 128, 64, 4
        $region40: #{decoder_forward.1} parent=35 // pred_fallthru
          _
        // Predicated region
        $region41: #{decoder_forward.1} parent=35 // pred_check
          %p316 = pneg %p152
        $region42: #{decoder_forward.1} parent=35 // pred_check_branch
          %318 = sbr.rel (%p316) target = $region44
        $region43: #{decoder_forward.1} parent=35 // pred_region
          %p319 = scmp.lt.s32.totalorder %s22, 1
          %s320 = scalar_select %p319, %s22, 1
          %s321 = scalar_lea.vmem %s6, %s320
        $region44: #{decoder_forward.1} parent=35 // pred_fallthru
          _
        // Predicated region
        $region45: #{decoder_forward.1} parent=35 // pred_check
          %p322 = pneg %p178
        $region46: #{decoder_forward.1} parent=35 // pred_check_branch
          %324 = sbr.rel (%p322) target = $region48
        $region47: #{decoder_forward.1} parent=35 // pred_region
          %p325 = scmp.lt.s32.totalorder %s22, 1
          %s326 = scalar_select %p325, %s22, 1
          %s327 = scalar_lea.vmem %s7, %s326
        $region48: #{decoder_forward.1} parent=35 // pred_fallthru
          _
        // Predicated region
        $region49: #{decoder_forward.1} parent=35 // pred_check
          %p328 = pneg %p204
        $region50: #{decoder_forward.1} parent=35 // pred_check_branch
          %330 = sbr.rel (%p328) target = $region52
        $region51: #{decoder_forward.1} parent=35 // pred_region
          %s331 = sand.u32 %s22, 1
          %s332 = scalar_lea.sflag [#allocation10], %s331
          %s333 = sand.u32 %s194, 1
          %s334 = smul.addr %s333, 64
          %s335 = scalar_lea.vmem [#allocation11], %s334
          %s336 = smul.u32 16, %s22
          %s338 = ssub.s32 1024, 1024
          %339 = vsyncadd %s332, %s338
          %s340 = smul.addr %s336, 64
          %s341 = scalar_lea.hbm %s8, %s340
          %s342 = sshll.u32 %s335, 4
          %s343 = int_to_ptr.vmem [resolvable:$true] %s342
          %348 = dma.hbm_to_vmem [thread:$0]  %s341, 1024, %s343, %s332, 64, 64, 4
        $region52: #{decoder_forward.1} parent=35 // pred_fallthru
          _
      $region36: #{decoder_forward.1} parent=5 // pred_fallthru
        _
      %p349 = scmp.le.s32.totalorder 1, %s22
      %p350 = scmp.lt.s32.totalorder %s22, 3
      %p351 = pnand %p349, %p350
      %p352 = pneg %p351
      // Predicated region
      $region53: #{decoder_forward.1} parent=5 // pred_check
        _
      $region54: #{decoder_forward.1} parent=5 // pred_check_branch
        %354 = sbr.rel (%p351) target = $region56
      $region55: #{decoder_forward.1} parent=5 // pred_region
        %s355 = ssub.s32 %s22, 1
        // Predicated region
        $region57: #{decoder_forward.1} parent=55 // pred_check
          %p356 = pneg %p64
        $region58: #{decoder_forward.1} parent=55 // pred_check_branch
          %358 = sbr.rel (%p356) target = $region60
        $region59: #{decoder_forward.1} parent=55 // pred_region
          %359 = dma.done [#allocation7], 1024
        $region60: #{decoder_forward.1} parent=55 // pred_fallthru
          _
        %s360 = sand.u32 %s27, 1
        %s361 = scalar_lea.sflag [#allocation10], %s360
        %s362 = sand.u32 %s119, 1
        %s363 = smul.addr %s362, 64
        %s364 = scalar_lea.vmem [#allocation9], %s363
        // Predicated region
        $region61: #{decoder_forward.1} parent=55 // pred_check
          %p365 = pneg %p132
        $region62: #{decoder_forward.1} parent=55 // pred_check_branch
          %367 = sbr.rel (%p365) target = $region64
        $region63: #{decoder_forward.1} parent=55 // pred_region
          %368 = dma.done %s361, 1024
        $region64: #{decoder_forward.1} parent=55 // pred_fallthru
          _
        %s369 = sand.u32 %s27, 1
        %s370 = scalar_lea.sflag [#allocation10], %s369
        %s371 = sand.u32 %s197, 1
        %s372 = smul.addr %s371, 64
        %s373 = scalar_lea.vmem [#allocation11], %s372
        // Predicated region
        $region65: #{decoder_forward.1} parent=55 // pred_check
          %p374 = pneg %p210
        $region66: #{decoder_forward.1} parent=55 // pred_check_branch
          %376 = sbr.rel (%p374) target = $region68
        $region67: #{decoder_forward.1} parent=55 // pred_region
          %377 = dma.done %s370, 1024
        $region68: #{decoder_forward.1} parent=55 // pred_fallthru
          _
        %p378 = pneg %p43
        %p379 = pneg %p40
        %p380 = pneg %p64
        %p381 = pneg %p61
        %p382 = pneg %p85
        %p383 = pneg %p82
        %p384 = pneg %p106
        %p385 = pneg %p103
        %s386 = sand.u32 %s27, 1
        %s387 = scalar_lea.sflag [#allocation10], %s386
        %s388 = sand.u32 %s119, 1
        %s389 = smul.addr %s388, 64
        %s390 = scalar_lea.vmem [#allocation9], %s389
        %p391 = pneg %p132
        %p392 = pneg %p129
        %p393 = scmp.lt.s32.totalorder %s27, 1
        %s394 = scalar_select %p393, %s27, 1
        %s395 = scalar_lea.vmem %s6, %s394
        %p396 = pneg %p158
        %p397 = pneg %p155
        %p398 = scmp.lt.s32.totalorder %s27, 1
        %s399 = scalar_select %p398, %s27, 1
        %s400 = scalar_lea.vmem %s7, %s399
        %p401 = pneg %p184
        %p402 = pneg %p181
        %s403 = sand.u32 %s27, 1
        %s404 = scalar_lea.sflag [#allocation10], %s403
        %s405 = sand.u32 %s197, 1
        %s406 = smul.addr %s405, 64
        %s407 = scalar_lea.vmem [#allocation11], %s406
        %p408 = pneg %p210
        %p409 = pneg %p207
        %p410 = pneg %p231
        %p411 = pneg %p228
        %p412 = pneg %p252
        %p413 = pneg %p249
        %p414 = scmp.lt.s32.totalorder %s27, 1
        %s415 = scalar_select %p414, %s27, 1
        %s416 = scalar_lea.vmem %s6, %s415
        %p417 = scmp.lt.s32.totalorder %s27, 1
        %s418 = scalar_select %p417, %s27, 1
        %s419 = scalar_lea.vmem %s7, %s418
        %s420 = smul.u32 16, %s27
        %s422 = sld [smem:[#allocation5]]
        %s423 = scvt.s32.f32 %s422
        %v424 = vstv %s423
        %v425 = vrcp.pop %v424
        %s426 = vtos %v425
        %p427 = scmp.eq.s32.totalorder %s27, 0
        // Predicated region
        $region69: #{decoder_forward.1} parent=55 // pred_check
          %p428 = pneg %p427
        $region70: #{decoder_forward.1} parent=55 // pred_check_branch
          %430 = sbr.rel (%p428) target = $region72
        $region71: #{decoder_forward.1} parent=55 // pred_region
          %v431 = vld [vmem:[%s1] sm:$0xf]
          %v432 = vld [vmem:[#allocation6] sm:$0xf]
          %v433 = vld [vmem:[#allocation6 + $0x4] sm:$0xf]
          %v434 = vld [vmem:[#allocation6 + $0x8] sm:$0xf]
          %v435 = vld [vmem:[#allocation6 + $0xc] sm:$0xf]
          %v436 = vld [vmem:[#allocation6 + $0x10] sm:$0xf]
          %v437 = vld [vmem:[#allocation6 + $0x14] sm:$0xf]
          %v438 = vld [vmem:[#allocation6 + $0x18] sm:$0xf]
          %v439 = vld [vmem:[#allocation6 + $0x1c] sm:$0xf]
          %v440 = vld [vmem:[#allocation6 + $0x20] sm:$0xf]
          %v441 = vld [vmem:[#allocation6 + $0x24] sm:$0xf]
          %v442 = vld [vmem:[#allocation6 + $0x28] sm:$0xf]
          %v443 = vld [vmem:[#allocation6 + $0x2c] sm:$0xf]
          %v444 = vld [vmem:[#allocation6 + $0x30] sm:$0xf]
          %v445 = vld [vmem:[#allocation6 + $0x34] sm:$0xf]
          %v446 = vld [vmem:[#allocation6 + $0x38] sm:$0xf]
          %v447 = vld [vmem:[#allocation6 + $0x3c] sm:$0xf]
          %v464 = vunpack.c.l.b16 %v432
          %v465 = vunpack.c.l.b16 %v433
          %v466 = vunpack.c.l.b16 %v434
          %v467 = vunpack.c.l.b16 %v435
          %v468 = vunpack.c.l.b16 %v436
          %v469 = vunpack.c.l.b16 %v437
          %v470 = vunpack.c.l.b16 %v438
          %v471 = vunpack.c.l.b16 %v439
          %v472 = vunpack.c.l.b16 %v440
          %v473 = vunpack.c.l.b16 %v441
          %v474 = vunpack.c.l.b16 %v442
          %v475 = vunpack.c.l.b16 %v443
          %v476 = vunpack.c.l.b16 %v444
          %v477 = vunpack.c.l.b16 %v445
          %v478 = vunpack.c.l.b16 %v446
          %v479 = vunpack.c.l.b16 %v447
          %v480 = vpack.c.b16 %v465, %v464
          %v481 = vpack.c.b16 %v467, %v466
          %v482 = vpack.c.b16 %v469, %v468
          %v483 = vpack.c.b16 %v471, %v470
          %v484 = vpack.c.b16 %v473, %v472
          %v485 = vpack.c.b16 %v475, %v474
          %v486 = vpack.c.b16 %v477, %v476
          %v487 = vpack.c.b16 %v479, %v478
          %496 = vmatprep.subr.bf16.mxu0 0
          %497 = vmatpush1.bf16.msra.mxu0 %v480
          %498 = vmatprep.subr.bf16.mxu0 0
          %499 = vmatpush1.bf16.msra.mxu0 %v481
          %500 = vmatprep.subr.bf16.mxu0 0
          %501 = vmatpush1.bf16.msra.mxu0 %v482
          %502 = vmatprep.subr.bf16.mxu0 0
          %503 = vmatpush1.bf16.msra.mxu0 %v483
          %504 = vmatprep.subr.bf16.mxu0 0
          %505 = vmatpush1.bf16.msra.mxu0 %v484
          %506 = vmatprep.subr.bf16.mxu0 0
          %507 = vmatpush1.bf16.msra.mxu0 %v485
          %508 = vmatprep.subr.bf16.mxu0 0
          %509 = vmatpush1.bf16.msra.mxu0 %v486
          %510 = vmatprep.subr.bf16.mxu0 0
          %511 = vmatpush1.bf16.msra.mxu0 %v487
          %512 = vmatprep.subr.bf16.mxu0 0
          %513 = vmatpush1.bf16.msra.mxu0 0
          %514 = vmatprep.subr.bf16.mxu0 0
          %515 = vmatpush1.bf16.msra.mxu0 0
          %516 = vmatprep.subr.bf16.mxu0 0
          %517 = vmatpush1.bf16.msra.mxu0 0
          %518 = vmatprep.subr.bf16.mxu0 0
          %519 = vmatpush1.bf16.msra.mxu0 0
          %520 = vmatprep.subr.bf16.mxu0 0
          %521 = vmatpush1.bf16.msra.mxu0 0
          %522 = vmatprep.subr.bf16.mxu0 0
          %523 = vmatpush1.bf16.msra.mxu0 0
          %524 = vmatprep.subr.bf16.mxu0 0
          %525 = vmatpush1.bf16.msra.mxu0 0
          %526 = vmatprep.subr.bf16.mxu0 0
          %527 = vmatpush1.bf16.msra.mxu0 0
          %528 = vmatprep.mubr.bf16.mxu0 0
          %529 = vmatmul.mubr.bf16.gmra.mrb[0].mxu0 %v431
          %v530 = vpop.f32.mrb[0].mxu0
          %v531 = vadd.f32 0.0, %v530
          %v532 = vpop.f32.mrb[0].mxu0
          %v533 = vpop.f32.mrb[0].mxu0
          %v534 = vpop.f32.mrb[0].mxu0
          %535 = vdwg.mxu0
          %v536 = vld [vmem:[%s3] sm:$0x1]
          %v537 = vld [vmem:[%s4] sm:$0x1]
          %v538 = vrot.slane %v531, 4
          %v539 = vadd.f32 %v531, %v538
          %v540 = vrot.slane %v539, 2
          %v541 = vadd.f32 %v539, %v540
          %v542 = vrot.slane %v541, 1
          %v543 = vadd.f32 %v541, %v542
          %v544 = vstv %s426
          %v545 = vmul.f32 %v543, %v544
          %v546 = vmul.f32 %v531, %v531
          %v547 = vrot.slane %v546, 4
          %v548 = vadd.f32 %v546, %v547
          %v549 = vrot.slane %v548, 2
          %v550 = vadd.f32 %v548, %v549
          %v551 = vrot.slane %v550, 1
          %v552 = vadd.f32 %v550, %v551
          %v553 = vmul.f32 %v552, %v544
          %v554 = vmul.f32 %v545, %v545
          %v555 = vsub.f32 %v553, %v554
          %v556 = vmax.f32 %v555, 0.0
          %v557 = vadd.f32 %v556, 1e-05
          %v558 = vrsqrt.pop %v557
          %v559 = vmul.f32 %v536, %v558
          %v560 = vmul.f32 %v545, %v559
          %v561 = vsub.f32 %v537, %v560
          %v563 = vlaneseq
          %v564 = vshrl.u32 %v563, 7
          %v565 = vsub.s32 0, %v564
          %v566 = vrot.slane %v559, %v565
          %v568 = vmul.f32 %v531, %v566
          %v570 = vlaneseq
          %v571 = vshrl.u32 %v570, 7
          %v572 = vsub.s32 0, %v571
          %v573 = vrot.slane %v561, %v572
          %v575 = vadd.f32 %v568, %v573
          %v576 = vmax.f32 %v575, 0.0
          %v577 = vpack.c.bf16 %v576, %v576
          %578 = vst [vmem:[#allocation2] sm:$0xf] %v577
          %579 = vst [vmem:[#allocation3] sm:$0xff] 0.0
        $region72: #{decoder_forward.1} parent=55 // pred_fallthru
          _
        %v580 = vld [vmem:[#allocation2] sm:$0xf]
        %v581 = vld [vmem:[%s364] sm:$0xf]
        %v582 = vld [vmem:[%s364 + $0x4] sm:$0xf]
        %v583 = vld [vmem:[%s364 + $0x8] sm:$0xf]
        %v584 = vld [vmem:[%s364 + $0xc] sm:$0xf]
        %v585 = vld [vmem:[%s364 + $0x10] sm:$0xf]
        %v586 = vld [vmem:[%s364 + $0x14] sm:$0xf]
        %v587 = vld [vmem:[%s364 + $0x18] sm:$0xf]
        %v588 = vld [vmem:[%s364 + $0x1c] sm:$0xf]
        %v589 = vld [vmem:[%s364 + $0x20] sm:$0xf]
        %v590 = vld [vmem:[%s364 + $0x24] sm:$0xf]
        %v591 = vld [vmem:[%s364 + $0x28] sm:$0xf]
        %v592 = vld [vmem:[%s364 + $0x2c] sm:$0xf]
        %v593 = vld [vmem:[%s364 + $0x30] sm:$0xf]
        %v594 = vld [vmem:[%s364 + $0x34] sm:$0xf]
        %v595 = vld [vmem:[%s364 + $0x38] sm:$0xf]
        %v596 = vld [vmem:[%s364 + $0x3c] sm:$0xf]
        %v613 = vunpack.c.l.b16 %v581
        %v614 = vunpack.c.l.b16 %v582
        %v615 = vunpack.c.l.b16 %v583
        %v616 = vunpack.c.l.b16 %v584
        %v617 = vunpack.c.l.b16 %v585
        %v618 = vunpack.c.l.b16 %v586
        %v619 = vunpack.c.l.b16 %v587
        %v620 = vunpack.c.l.b16 %v588
        %v621 = vunpack.c.l.b16 %v589
        %v622 = vunpack.c.l.b16 %v590
        %v623 = vunpack.c.l.b16 %v591
        %v624 = vunpack.c.l.b16 %v592
        %v625 = vunpack.c.l.b16 %v593
        %v626 = vunpack.c.l.b16 %v594
        %v627 = vunpack.c.l.b16 %v595
        %v628 = vunpack.c.l.b16 %v596
        %v629 = vpack.c.b16 %v614, %v613
        %v630 = vpack.c.b16 %v616, %v615
        %v631 = vpack.c.b16 %v618, %v617
        %v632 = vpack.c.b16 %v620, %v619
        %v633 = vpack.c.b16 %v622, %v621
        %v634 = vpack.c.b16 %v624, %v623
        %v635 = vpack.c.b16 %v626, %v625
        %v636 = vpack.c.b16 %v628, %v627
        %645 = vmatprep.subr.bf16.mxu0 0
        %646 = vmatpush1.bf16.msra.mxu0 %v629
        %647 = vmatprep.subr.bf16.mxu0 0
        %648 = vmatpush1.bf16.msra.mxu0 %v630
        %649 = vmatprep.subr.bf16.mxu0 0
        %650 = vmatpush1.bf16.msra.mxu0 %v631
        %651 = vmatprep.subr.bf16.mxu0 0
        %652 = vmatpush1.bf16.msra.mxu0 %v632
        %653 = vmatprep.subr.bf16.mxu0 0
        %654 = vmatpush1.bf16.msra.mxu0 %v633
        %655 = vmatprep.subr.bf16.mxu0 0
        %656 = vmatpush1.bf16.msra.mxu0 %v634
        %657 = vmatprep.subr.bf16.mxu0 0
        %658 = vmatpush1.bf16.msra.mxu0 %v635
        %659 = vmatprep.subr.bf16.mxu0 0
        %660 = vmatpush1.bf16.msra.mxu0 %v636
        %661 = vmatprep.subr.bf16.mxu0 0
        %662 = vmatpush1.bf16.msra.mxu0 0
        %663 = vmatprep.subr.bf16.mxu0 0
        %664 = vmatpush1.bf16.msra.mxu0 0
        %665 = vmatprep.subr.bf16.mxu0 0
        %666 = vmatpush1.bf16.msra.mxu0 0
        %667 = vmatprep.subr.bf16.mxu0 0
        %668 = vmatpush1.bf16.msra.mxu0 0
        %669 = vmatprep.subr.bf16.mxu0 0
        %670 = vmatpush1.bf16.msra.mxu0 0
        %671 = vmatprep.subr.bf16.mxu0 0
        %672 = vmatpush1.bf16.msra.mxu0 0
        %673 = vmatprep.subr.bf16.mxu0 0
        %674 = vmatpush1.bf16.msra.mxu0 0
        %675 = vmatprep.subr.bf16.mxu0 0
        %676 = vmatpush1.bf16.msra.mxu0 0
        %677 = vmatprep.mubr.bf16.mxu0 0
        %678 = vmatmul.mubr.bf16.gmra.mrb[0].mxu0 %v580
        %v679 = vpop.f32.mrb[0].mxu0
        %v680 = vadd.f32 0.0, %v679
        %v681 = vpop.f32.mrb[0].mxu0
        %v682 = vpop.f32.mrb[0].mxu0
        %v683 = vpop.f32.mrb[0].mxu0
        %684 = vdwg.mxu0
        %v685 = vlaneseq
        %v686 = vshrl.u32 %v685, 7
        %v687 = vstv %s422
        %vm688 = vcmp.lt.s32.totalorder %v686, %v687
        %v689 = vsel %vm688, %v680, 0.0
        %v690 = vld [vmem:[%s416] sm:$0x1]
        %v691 = vld [vmem:[%s419] sm:$0x1]
        %v692 = vrot.slane %v689, 4
        %v693 = vadd.f32 %v689, %v692
        %v694 = vrot.slane %v693, 2
        %v695 = vadd.f32 %v693, %v694
        %v696 = vrot.slane %v695, 1
        %v697 = vadd.f32 %v695, %v696
        %v698 = vstv %s426
        %v699 = vmul.f32 %v697, %v698
        %v700 = vmul.f32 %v689, %v689
        %v701 = vrot.slane %v700, 4
        %v702 = vadd.f32 %v700, %v701
        %v703 = vrot.slane %v702, 2
        %v704 = vadd.f32 %v702, %v703
        %v705 = vrot.slane %v704, 1
        %v706 = vadd.f32 %v704, %v705
        %v707 = vmul.f32 %v706, %v698
        %v708 = vmul.f32 %v699, %v699
        %v709 = vsub.f32 %v707, %v708
        %v710 = vmax.f32 %v709, 0.0
        %v711 = vadd.f32 %v710, 1e-05
        %v712 = vrsqrt.pop %v711
        %v713 = vmul.f32 %v690, %v712
        %v714 = vmul.f32 %v699, %v713
        %v715 = vsub.f32 %v691, %v714
        %v717 = vlaneseq
        %v718 = vshrl.u32 %v717, 7
        %v719 = vsub.s32 0, %v718
        %v720 = vrot.slane %v713, %v719
        %v722 = vmul.f32 %v680, %v720
        %v724 = vlaneseq
        %v725 = vshrl.u32 %v724, 7
        %v726 = vsub.s32 0, %v725
        %v727 = vrot.slane %v715, %v726
        %v729 = vadd.f32 %v722, %v727
        %v730 = vmax.f32 %v729, 0.0
        %v731 = vpack.c.bf16 %v730, %v730
        %v732 = vld [vmem:[#allocation3] sm:$0xff]
        %v733 = vld [vmem:[%s373] sm:$0xf]
        %v734 = vld [vmem:[%s373 + $0x4] sm:$0xf]
        %v735 = vld [vmem:[%s373 + $0x8] sm:$0xf]
        %v736 = vld [vmem:[%s373 + $0xc] sm:$0xf]
        %v737 = vld [vmem:[%s373 + $0x10] sm:$0xf]
        %v738 = vld [vmem:[%s373 + $0x14] sm:$0xf]
        %v739 = vld [vmem:[%s373 + $0x18] sm:$0xf]
        %v740 = vld [vmem:[%s373 + $0x1c] sm:$0xf]
        %v741 = vld [vmem:[%s373 + $0x20] sm:$0xf]
        %v742 = vld [vmem:[%s373 + $0x24] sm:$0xf]
        %v743 = vld [vmem:[%s373 + $0x28] sm:$0xf]
        %v744 = vld [vmem:[%s373 + $0x2c] sm:$0xf]
        %v745 = vld [vmem:[%s373 + $0x30] sm:$0xf]
        %v746 = vld [vmem:[%s373 + $0x34] sm:$0xf]
        %v747 = vld [vmem:[%s373 + $0x38] sm:$0xf]
        %v748 = vld [vmem:[%s373 + $0x3c] sm:$0xf]
        %v765 = vunpack.c.l.b16 %v733
        %v766 = vunpack.c.l.b16 %v734
        %v767 = vunpack.c.l.b16 %v735
        %v768 = vunpack.c.l.b16 %v736
        %v769 = vunpack.c.l.b16 %v737
        %v770 = vunpack.c.l.b16 %v738
        %v771 = vunpack.c.l.b16 %v739
        %v772 = vunpack.c.l.b16 %v740
        %v773 = vunpack.c.l.b16 %v741
        %v774 = vunpack.c.l.b16 %v742
        %v775 = vunpack.c.l.b16 %v743
        %v776 = vunpack.c.l.b16 %v744
        %v777 = vunpack.c.l.b16 %v745
        %v778 = vunpack.c.l.b16 %v746
        %v779 = vunpack.c.l.b16 %v747
        %v780 = vunpack.c.l.b16 %v748
        %v781 = vpack.c.b16 %v766, %v765
        %v782 = vpack.c.b16 %v768, %v767
        %v783 = vpack.c.b16 %v770, %v769
        %v784 = vpack.c.b16 %v772, %v771
        %v785 = vpack.c.b16 %v774, %v773
        %v786 = vpack.c.b16 %v776, %v775
        %v787 = vpack.c.b16 %v778, %v777
        %v788 = vpack.c.b16 %v780, %v779
        %797 = vmatprep.subr.bf16.mxu0 0
        %798 = vmatpush1.bf16.msra.mxu0 %v781
        %799 = vmatprep.subr.bf16.mxu0 0
        %800 = vmatpush1.bf16.msra.mxu0 %v782
        %801 = vmatprep.subr.bf16.mxu0 0
        %802 = vmatpush1.bf16.msra.mxu0 %v783
        %803 = vmatprep.subr.bf16.mxu0 0
        %804 = vmatpush1.bf16.msra.mxu0 %v784
        %805 = vmatprep.subr.bf16.mxu0 0
        %806 = vmatpush1.bf16.msra.mxu0 %v785
        %807 = vmatprep.subr.bf16.mxu0 0
        %808 = vmatpush1.bf16.msra.mxu0 %v786
        %809 = vmatprep.subr.bf16.mxu0 0
        %810 = vmatpush1.bf16.msra.mxu0 %v787
        %811 = vmatprep.subr.bf16.mxu0 0
        %812 = vmatpush1.bf16.msra.mxu0 %v788
        %813 = vmatprep.subr.bf16.mxu0 0
        %814 = vmatpush1.bf16.msra.mxu0 0
        %815 = vmatprep.subr.bf16.mxu0 0
        %816 = vmatpush1.bf16.msra.mxu0 0
        %817 = vmatprep.subr.bf16.mxu0 0
        %818 = vmatpush1.bf16.msra.mxu0 0
        %819 = vmatprep.subr.bf16.mxu0 0
        %820 = vmatpush1.bf16.msra.mxu0 0
        %821 = vmatprep.subr.bf16.mxu0 0
        %822 = vmatpush1.bf16.msra.mxu0 0
        %823 = vmatprep.subr.bf16.mxu0 0
        %824 = vmatpush1.bf16.msra.mxu0 0
        %825 = vmatprep.subr.bf16.mxu0 0
        %826 = vmatpush1.bf16.msra.mxu0 0
        %827 = vmatprep.subr.bf16.mxu0 0
        %828 = vmatpush1.bf16.msra.mxu0 0
        %829 = vmatprep.mubr.bf16.mxu0 0
        %830 = vmatmul.mubr.bf16.gmra.mrb[0].mxu0 %v731
        %v831 = vpop.f32.mrb[0].mxu0
        %v832 = vadd.f32 0.0, %v831
        %v833 = vpop.f32.mrb[0].mxu0
        %v834 = vpop.f32.mrb[0].mxu0
        %v835 = vpop.f32.mrb[0].mxu0
        %836 = vdwg.mxu0
        %v837 = vadd.f32 %v732, %v832
        %838 = vst [vmem:[#allocation3] sm:$0xff] %v837
        %p839 = scmp.eq.s32.totalorder %s27, 1
        // Predicated region
        $region73: #{decoder_forward.1} parent=55 // pred_check
          %p840 = pneg %p839
        $region74: #{decoder_forward.1} parent=55 // pred_check_branch
          %842 = sbr.rel (%p840) target = $region76
        $region75: #{decoder_forward.1} parent=55 // pred_region
          %v843 = vld [vmem:[#allocation3] sm:$0xff]
          %v844 = vld [vmem:[%s9] sm:$0x1]
          %v846 = vlaneseq
          %v847 = vshrl.u32 %v846, 7
          %v848 = vsub.s32 0, %v847
          %v849 = vrot.slane %v844, %v848
          %v851 = vadd.f32 %v843, %v849
          %852 = vst [vmem:[#allocation12] sm:$0xff] %v851
        $region76: #{decoder_forward.1} parent=55 // pred_fallthru
          _
        // Predicated region
        $region77: #{decoder_forward.1} parent=55 // pred_check
          %p853 = pneg %p249
        $region78: #{decoder_forward.1} parent=55 // pred_check_branch
          %855 = sbr.rel (%p853) target = $region80
        $region79: #{decoder_forward.1} parent=55 // pred_region
          %s857 = ssub.s32 128, 128
          %858 = vsyncadd [#allocation8], %s857
          %s860 = sshll.u32 [#allocation12], 4
          %s861 = int_to_ptr.vmem [resolvable:$true] %s860
          %863 = dma.vmem_to_hbm [thread:$0]  %s861, 128, %s10, [#allocation8]
        $region80: #{decoder_forward.1} parent=55 // pred_fallthru
          _
        // Predicated region
        $region81: #{decoder_forward.1} parent=55 // pred_check
          %p864 = pneg %p249
        $region82: #{decoder_forward.1} parent=55 // pred_check_branch
          %866 = sbr.rel (%p864) target = $region84
        $region83: #{decoder_forward.1} parent=55 // pred_region
          %867 = dma.done [#allocation8], 128
        $region84: #{decoder_forward.1} parent=55 // pred_fallthru
          _
      $region56: #{decoder_forward.1} parent=5 // pred_fallthru
        _
      %p868 = scmp.le.s32.totalorder 2, %s22
      // Predicated region
      $region85: #{decoder_forward.1} parent=5 // pred_check
        %p869 = pneg %p868
      $region86: #{decoder_forward.1} parent=5 // pred_check_branch
        %871 = sbr.rel (%p869) target = $region88
      $region87: #{decoder_forward.1} parent=5 // pred_region
        %s872 = ssub.s32 %s22, 2
      $region88: #{decoder_forward.1} parent=5 // pred_fallthru
        _
    $region6: #{decoder_forward.1} parent=1 // loop_footer
      %s26 = sadd.s32 1, %s22
    $region7: #{decoder_forward.1} parent=1 // loop_footer_branch
      %21 = sbr.rel target = $region3
    $region8: #{decoder_forward.1} parent=1 // loop_exit
      _
    %873 = vsyncpa [#allocation7], 1
    %s874 = scalar_lea.sflag [#allocation7], 1
    %875 = vsyncpa %s874, 1
    %876 = vsyncpa [#allocation10], 1
    %s877 = scalar_lea.sflag [#allocation10], 1
    %878 = vsyncpa %s877, 1
    %879 = vsyncpa [#allocation8], 1
    %s880 = scalar_lea.sflag [#allocation8], 1
    %881 = vsyncpa %s880, 1

</llo_original>
